<compile_context>
chip_gen: v7x
topology: tpu7x:2x2x1
jax: 0.10.0
libtpu: 0.0.40
codegen_flags: <defaults>
</compile_context>

<pallas_src>
import jax
import jax.numpy as jnp
from jax.experimental import pallas as pl
from jax.experimental.pallas import tpu as pltpu


# ---------------------------------------------------------------------------
# Kernel
# ---------------------------------------------------------------------------
def _residual_block_kernel(x_ref, m1_ref, m2_ref, bias_ref, o_ref, col_ref):
    """One batch block, fully resident in VMEM.

    Shapes (lane-dense, (W, C) fused on the lane axis, WC = W*C = 128):
      x_ref, o_ref  : (Nb, H, WC)
      m1_ref, m2_ref: (3*WC, WC)   stacked block-Toeplitz conv matrices
      bias_ref      : (1, WC)      all BN biases folded, tiled over W
      col_ref       : (Nb, H, 3*WC) VMEM im2col scratch (H reflection pad folded in)
    """
    Nb, H, WC = x_ref.shape

    def conv(src, m_ref):
        # Build im2col with the H reflection pad folded in.  Lane offsets are
        # multiples of WC=128, so every store below is lane-aligned; the W
        # reflection, 3-tap W conv and channel contraction are baked into m_ref.
        col_ref[:, :, WC:2 * WC] = src                                   # dy=1: row h
        col_ref[:, 1:H, 0:WC] = src[:, 0:H - 1, :]                        # dy=0: row h-1
        col_ref[:, 0:1, 0:WC] = src[:, 1:2, :]                            #   reflect -1 -> 1
        col_ref[:, 0:H - 1, 2 * WC:3 * WC] = src[:, 1:H, :]               # dy=2: row h+1
        col_ref[:, H - 1:H, 2 * WC:3 * WC] = src[:, H - 2:H - 1, :]       #   reflect H -> H-2
        lhs = col_ref[...].reshape(Nb * H, 3 * WC)                        # free: merges leading dims
        out = jnp.dot(lhs, m_ref[...], preferred_element_type=jnp.float32)
        return out.reshape(Nb, H, WC)

    x = x_ref[...]
    y = conv(x, m1_ref)     # conv1 (its BatchNorm is folded into conv2 / bias)
    # nn.LeakyReLU(True): negative_slope == 1.0 -> exact identity, no op emitted.
    # nn.Dropout(0.5): identity in eval mode.
    # TODO(synk): training-mode dropout masking / batch-statistic BatchNorm are not implemented.
    y = conv(y, m2_ref)     # conv2 with BN1 (input) and BN2 (output) scales pre-folded
    o_ref[...] = x + y + bias_ref[...].reshape(1, 1, WC)


# ---------------------------------------------------------------------------
# Host-side weight preprocessing (one-time, outside the hot path)
# ---------------------------------------------------------------------------
def _conv3x3_as_stacked_lane_matmul(w_hwio, W):
    """HWIO (3,3,Ci,Co) conv weight -> (3*W*Ci, W*Co) stacked block-Toeplitz matrix.

    Row index = dy*W*Ci + w_in*Ci + ci, col index = w_out*Co + co.  Multiplying the
    im2col row [padded(h+0), padded(h+1), padded(h+2)] (each lane block reflected
    along W host-side via this matrix) performs ReflectionPad2d(1) along W, the full
    3x3 convolution and the channel contraction in one MXU matmul.
    """
    KH, KW, Ci, Co = w_hwio.shape
    w_out = jnp.arange(W)
    mats = []
    for dy in range(KH):
        m = jnp.zeros((W * Ci, W * Co), jnp.float32)
        for dx in range(KW):
            src = w_out + dx - (KW // 2)                          # input col before reflection
            src = jnp.where(src < 0, -src, src)                   # left edge:  -1 -> 1
            src = jnp.where(src > W - 1, 2 * (W - 1) - src, src)  # right edge: W -> W-2
            sel = (jnp.arange(W)[:, None] == src[None, :]).astype(jnp.float32)  # (W_in, W_out)
            m = m + jnp.kron(sel, w_hwio[dy, dx].astype(jnp.float32))
        mats.append(m)
    return jnp.concatenate(mats, axis=0)                          # (3*W*Ci, W*Co)


def prepare_residual_block_params(params, W, eps=1e-5):
    """Layout conversion + BN folding, done once per set of weights.

    Folding BN1 into conv2 is exact only because the ops between the two convs are
    identities in this module (LeakyReLU with slope 1.0, eval-mode Dropout), and the
    constant-bias fold is exact only under reflection padding.
    """
    w1 = jnp.transpose(params["w1"], (2, 3, 1, 0)).astype(jnp.float32)  # OIHW -> HWIO
    w2 = jnp.transpose(params["w2"], (2, 3, 1, 0)).astype(jnp.float32)

    s1 = params["bn1_gamma"] / jnp.sqrt(params["bn1_var"] + eps)
    b1 = params["bn1_beta"] - params["bn1_mean"] * s1
    s2 = params["bn2_gamma"] / jnp.sqrt(params["bn2_var"] + eps)
    b2 = params["bn2_beta"] - params["bn2_mean"] * s2

    # conv2 sees BN1's output: fold s1 into its input channels and s2 into its
    # output channels; BN1's bias becomes a spatially constant conv2 response
    # that is folded into the final bias together with BN2's bias.
    w2_folded = w2 * s1[None, None, :, None] * s2[None, None, None, :]
    k = jnp.einsum("hwio,i->o", w2, b1)                       # conv2 response to constant b1
    bias = (b2 + s2 * k).astype(jnp.float32)                  # (C,)

    return {
        "m1": _conv3x3_as_stacked_lane_matmul(w1, W),         # (3*W*C, W*C)
        "m2": _conv3x3_as_stacked_lane_matmul(w2_folded, W),  # (3*W*C, W*C)
        "bias": jnp.tile(bias, W)[None, :],                   # (1, W*C), lane idx = w*C + c
    }


# ---------------------------------------------------------------------------
# Wrappers
# ---------------------------------------------------------------------------
def _pick_batch_block(N, H, WC, budget_bytes=8 << 20):
    """Largest divisor of N whose resident VMEM footprint stays under budget."""
    # in + out (double-buffered) + im2col scratch, per batch element
    per = H * WC * 4 * (2 + 2) + H * 3 * WC * 4
    nb = max(1, min(N, budget_bytes // per))
    while N % nb:
        nb -= 1
    return nb


def residual_block_nhwc(x_nhwc, prepared):
    """Transpose-free lane-dense path (use this in an NHWC end-to-end model)."""
    N, H, W, C = x_nhwc.shape
    WC = W * C
    x = x_nhwc.reshape(N, H, WC)                    # free reshape, no transpose

    Nb = _pick_batch_block(N, H, WC)
    grid_steps = N // Nb
    # Single grid step at small N; only ask for megacore sharding when there is
    # enough per-core work to amortize launch/sync.
    sem = ("arbitrary",) if grid_steps == 1 else ("parallel",)

    out = pl.pallas_call(
        _residual_block_kernel,
        out_shape=jax.ShapeDtypeStruct((N, H, WC), jnp.float32),
        grid_spec=pltpu.PrefetchScalarGridSpec(
            num_scalar_prefetch=0,
            grid=(grid_steps,),
            in_specs=[
                pl.BlockSpec((Nb, H, WC), lambda n: (n, 0, 0)),
                pl.BlockSpec((3 * WC, WC), lambda n: (0, 0)),
                pl.BlockSpec((3 * WC, WC), lambda n: (0, 0)),
                pl.BlockSpec((1, WC), lambda n: (0, 0)),
            ],
            out_specs=pl.BlockSpec((Nb, H, WC), lambda n: (n, 0, 0)),
            scratch_shapes=[pltpu.VMEM((Nb, H, 3 * WC), jnp.float32)],
        ),
        compiler_params=pltpu.CompilerParams(dimension_semantics=sem),
    )(x, prepared["m1"], prepared["m2"], prepared["bias"])

    return out.reshape(N, H, W, C)


@jax.jit
def residual_block(x_nchw, prepared):
    # NCHW <-> NHWC transposes kept only for PyTorch drop-in parity; in an
    # end-to-end NHWC pipeline call residual_block_nhwc directly (no transposes).
    x = jnp.transpose(x_nchw, (0, 2, 3, 1)).astype(jnp.float32)
    out = residual_block_nhwc(x, prepared)
    return jnp.transpose(out, (0, 3, 1, 2))


# ---------------------------------------------------------------------------
# Pure-JAX reference (independent of the folded/Toeplitz machinery)
# ---------------------------------------------------------------------------
def residual_block_reference(x_nchw, params):
    eps = 1e-5

    def conv_nhwc(t, w_hwio):
        tp = jnp.pad(t, ((0, 0), (1, 1), (1, 1), (0, 0)), mode="reflect")
        return jax.lax.conv_general_dilated(
            tp, w_hwio, window_strides=(1, 1), padding="VALID",
            dimension_numbers=("NHWC", "HWIO", "NHWC"))

    x = jnp.transpose(x_nchw, (0, 2, 3, 1)).astype(jnp.float32)
    w1 = jnp.transpose(params["w1"], (2, 3, 1, 0)).astype(jnp.float32)
    w2 = jnp.transpose(params["w2"], (2, 3, 1, 0)).astype(jnp.float32)

    s1 = params["bn1_gamma"] / jnp.sqrt(params["bn1_var"] + eps)
    b1 = params["bn1_beta"] - params["bn1_mean"] * s1
    s2 = params["bn2_gamma"] / jnp.sqrt(params["bn2_var"] + eps)
    b2 = params["bn2_beta"] - params["bn2_mean"] * s2

    y = conv_nhwc(x, w1) * s1 + b1      # LeakyReLU(slope=1.0) and eval Dropout are identities
    y = conv_nhwc(y, w2) * s2 + b2
    out = x + y
    return jnp.transpose(out, (0, 3, 1, 2))


# ---------------------------------------------------------------------------
# Main
# ---------------------------------------------------------------------------
if __name__ == "__main__":
    num_filters = 8
    N, H, W = 2, 16, 16   # W * num_filters == 128: one full lane row

    key = jax.random.PRNGKey(0)
    k = jax.random.split(key, 11)

    params = {
        # conv weights in PyTorch OIHW layout: (out_ch, in_ch, 3, 3)
        "w1": 0.1 * jax.random.normal(k[0], (num_filters, num_filters, 3, 3), jnp.float32),
        "w2": 0.1 * jax.random.normal(k[1], (num_filters, num_filters, 3, 3), jnp.float32),
        "bn1_gamma": jax.random.uniform(k[2], (num_filters,), jnp.float32, 0.5, 1.5),
        "bn1_beta": 0.1 * jax.random.normal(k[3], (num_filters,), jnp.float32),
        "bn1_mean": 0.1 * jax.random.normal(k[4], (num_filters,), jnp.float32),
        "bn1_var": jax.random.uniform(k[5], (num_filters,), jnp.float32, 0.5, 1.5),
        "bn2_gamma": jax.random.uniform(k[6], (num_filters,), jnp.float32, 0.5, 1.5),
        "bn2_beta": 0.1 * jax.random.normal(k[7], (num_filters,), jnp.float32),
        "bn2_mean": 0.1 * jax.random.normal(k[8], (num_filters,), jnp.float32),
        "bn2_var": jax.random.uniform(k[9], (num_filters,), jnp.float32, 0.5, 1.5),
    }

    x = jax.random.normal(k[10], (N, num_filters, H, W), jnp.float32)   # NCHW like PyTorch

    prepared = prepare_residual_block_params(params, W)    # one-time weight preprocessing
    out = jax.block_until_ready(residual_block(x, prepared))
    ref = jax.block_until_ready(residual_block_reference(x, params))

    assert out.shape == x.shape, (out.shape, x.shape)
    if not jnp.allclose(out, ref, rtol=1e-4, atol=1e-4):
        max_err = float(jnp.max(jnp.abs(out - ref)))
        raise AssertionError(f"Pallas kernel mismatch vs reference, max abs err = {max_err}")

    print("KERNEL_OK")
</pallas_src>

<mosaic_0001>
module attributes {stable_mosaic.version = 11 : i64} {
  func.func @_residual_block_kernel(%arg0: i32, %arg1: memref<2x16x128xf32, #tpu.memory_space<vmem>>, %arg2: memref<384x128xf32, #tpu.memory_space<vmem>>, %arg3: memref<384x128xf32, #tpu.memory_space<vmem>>, %arg4: memref<1x128xf32, #tpu.memory_space<vmem>>, %arg5: memref<2x16x128xf32, #tpu.memory_space<vmem>>, %arg6: memref<2x16x384xf32, #tpu.memory_space<vmem>>) attributes {dimension_semantics = [#tpu.dimension_semantics<arbitrary>], iteration_bounds = array<i64: 1>, scalar_prefetch = 0 : i64, scratch_operands = 1 : i64, tpu.core_type = #tpu.core_type<tc>, window_params = [{transform_indices = @transform_0, window_bounds = array<i64: 2, 16, 128>}, {pipeline_mode = #tpu.pipeline_mode<synchronous>, transform_indices = @transform_1, window_bounds = array<i64: 384, 128>}, {pipeline_mode = #tpu.pipeline_mode<synchronous>, transform_indices = @transform_2, window_bounds = array<i64: 384, 128>}, {pipeline_mode = #tpu.pipeline_mode<synchronous>, transform_indices = @transform_3, window_bounds = array<i64: 1, 128>}, {transform_indices = @transform_4, window_bounds = array<i64: 2, 16, 128>}]} {
    %c0 = arith.constant 0 : index
    %c0_0 = arith.constant 0 : index
    %c0_1 = arith.constant 0 : index
    %0 = vector.load %arg1[%c0, %c0_0, %c0_1] : memref<2x16x128xf32, #tpu.memory_space<vmem>>, vector<2x16x128xf32>
    %c0_2 = arith.constant 0 : index
    %c0_3 = arith.constant 0 : index
    %c128 = arith.constant 128 : index
    %1 = vector.load %arg6[%c0_2, %c0_3, %c128] : memref<2x16x384xf32, #tpu.memory_space<vmem>>, vector<2x16x128xf32>
    tpu.vector_store %arg6[%c0_2, %c0_3, %c128], %0 {strides = array<i32>} : memref<2x16x384xf32, #tpu.memory_space<vmem>>, vector<2x16x128xf32>,
    %2 = vector.extract_strided_slice %0 {offsets = [0, 0, 0], sizes = [2, 15, 128], strides = [1, 1, 1]} : vector<2x16x128xf32> to vector<2x15x128xf32>
    %c0_4 = arith.constant 0 : index
    %c1 = arith.constant 1 : index
    %c0_5 = arith.constant 0 : index
    %3 = vector.load %arg6[%c0_4, %c1, %c0_5] : memref<2x16x384xf32, #tpu.memory_space<vmem>>, vector<2x15x128xf32>
    tpu.vector_store %arg6[%c0_4, %c1, %c0_5], %2 {strides = array<i32>} : memref<2x16x384xf32, #tpu.memory_space<vmem>>, vector<2x15x128xf32>,
    %4 = vector.extract_strided_slice %0 {offsets = [0, 1, 0], sizes = [2, 1, 128], strides = [1, 1, 1]} : vector<2x16x128xf32> to vector<2x1x128xf32>
    %c0_6 = arith.constant 0 : index
    %c0_7 = arith.constant 0 : index
    %c0_8 = arith.constant 0 : index
    %5 = vector.load %arg6[%c0_6, %c0_7, %c0_8] : memref<2x16x384xf32, #tpu.memory_space<vmem>>, vector<2x1x128xf32>
    tpu.vector_store %arg6[%c0_6, %c0_7, %c0_8], %4 {strides = array<i32>} : memref<2x16x384xf32, #tpu.memory_space<vmem>>, vector<2x1x128xf32>,
    %6 = vector.extract_strided_slice %0 {offsets = [0, 1, 0], sizes = [2, 15, 128], strides = [1, 1, 1]} : vector<2x16x128xf32> to vector<2x15x128xf32>
    %c0_9 = arith.constant 0 : index
    %c0_10 = arith.constant 0 : index
    %c256 = arith.constant 256 : index
    %7 = vector.load %arg6[%c0_9, %c0_10, %c256] : memref<2x16x384xf32, #tpu.memory_space<vmem>>, vector<2x15x128xf32>
    tpu.vector_store %arg6[%c0_9, %c0_10, %c256], %6 {strides = array<i32>} : memref<2x16x384xf32, #tpu.memory_space<vmem>>, vector<2x15x128xf32>,
    %8 = vector.extract_strided_slice %0 {offsets = [0, 14, 0], sizes = [2, 1, 128], strides = [1, 1, 1]} : vector<2x16x128xf32> to vector<2x1x128xf32>
    %c0_11 = arith.constant 0 : index
    %c15 = arith.constant 15 : index
    %c256_12 = arith.constant 256 : index
    %9 = vector.load %arg6[%c0_11, %c15, %c256_12] : memref<2x16x384xf32, #tpu.memory_space<vmem>>, vector<2x1x128xf32>
    tpu.vector_store %arg6[%c0_11, %c15, %c256_12], %8 {strides = array<i32>} : memref<2x16x384xf32, #tpu.memory_space<vmem>>, vector<2x1x128xf32>,
    %c0_13 = arith.constant 0 : index
    %c0_14 = arith.constant 0 : index
    %c0_15 = arith.constant 0 : index
    %10 = vector.load %arg6[%c0_13, %c0_14, %c0_15] : memref<2x16x384xf32, #tpu.memory_space<vmem>>, vector<2x16x384xf32>
    %11 = vector.shape_cast %10 : vector<2x16x384xf32> to vector<32x384xf32>
    %c0_16 = arith.constant 0 : index
    %c0_17 = arith.constant 0 : index
    %12 = vector.load %arg2[%c0_16, %c0_17] : memref<384x128xf32, #tpu.memory_space<vmem>>, vector<384x128xf32>
    %cst = arith.constant dense<0.000000e+00> : vector<32x128xf32>
    %13 = tpu.matmul %11, %12, %cst {dimension_numbers = #tpu.dot_dimension_numbers<[1], [0], [0], [1], [0, 0, 1, 1], [], []>} : vector<32x384xf32>, vector<384x128xf32>, vector<32x128xf32> -> vector<32x128xf32>
    %14 = vector.shape_cast %13 : vector<32x128xf32> to vector<2x16x128xf32>
    %c0_18 = arith.constant 0 : index
    %c0_19 = arith.constant 0 : index
    %c128_20 = arith.constant 128 : index
    %15 = vector.load %arg6[%c0_18, %c0_19, %c128_20] : memref<2x16x384xf32, #tpu.memory_space<vmem>>, vector<2x16x128xf32>
    tpu.vector_store %arg6[%c0_18, %c0_19, %c128_20], %14 {strides = array<i32>} : memref<2x16x384xf32, #tpu.memory_space<vmem>>, vector<2x16x128xf32>,
    %16 = vector.extract_strided_slice %14 {offsets = [0, 0, 0], sizes = [2, 15, 128], strides = [1, 1, 1]} : vector<2x16x128xf32> to vector<2x15x128xf32>
    %c0_21 = arith.constant 0 : index
    %c1_22 = arith.constant 1 : index
    %c0_23 = arith.constant 0 : index
    %17 = vector.load %arg6[%c0_21, %c1_22, %c0_23] : memref<2x16x384xf32, #tpu.memory_space<vmem>>, vector<2x15x128xf32>
    tpu.vector_store %arg6[%c0_21, %c1_22, %c0_23], %16 {strides = array<i32>} : memref<2x16x384xf32, #tpu.memory_space<vmem>>, vector<2x15x128xf32>,
    %18 = vector.extract_strided_slice %14 {offsets = [0, 1, 0], sizes = [2, 1, 128], strides = [1, 1, 1]} : vector<2x16x128xf32> to vector<2x1x128xf32>
    %c0_24 = arith.constant 0 : index
    %c0_25 = arith.constant 0 : index
    %c0_26 = arith.constant 0 : index
    %19 = vector.load %arg6[%c0_24, %c0_25, %c0_26] : memref<2x16x384xf32, #tpu.memory_space<vmem>>, vector<2x1x128xf32>
    tpu.vector_store %arg6[%c0_24, %c0_25, %c0_26], %18 {strides = array<i32>} : memref<2x16x384xf32, #tpu.memory_space<vmem>>, vector<2x1x128xf32>,
    %20 = vector.extract_strided_slice %14 {offsets = [0, 1, 0], sizes = [2, 15, 128], strides = [1, 1, 1]} : vector<2x16x128xf32> to vector<2x15x128xf32>
    %c0_27 = arith.constant 0 : index
    %c0_28 = arith.constant 0 : index
    %c256_29 = arith.constant 256 : index
    %21 = vector.load %arg6[%c0_27, %c0_28, %c256_29] : memref<2x16x384xf32, #tpu.memory_space<vmem>>, vector<2x15x128xf32>
    tpu.vector_store %arg6[%c0_27, %c0_28, %c256_29], %20 {strides = array<i32>} : memref<2x16x384xf32, #tpu.memory_space<vmem>>, vector<2x15x128xf32>,
    %22 = vector.extract_strided_slice %14 {offsets = [0, 14, 0], sizes = [2, 1, 128], strides = [1, 1, 1]} : vector<2x16x128xf32> to vector<2x1x128xf32>
    %c0_30 = arith.constant 0 : index
    %c15_31 = arith.constant 15 : index
    %c256_32 = arith.constant 256 : index
    %23 = vector.load %arg6[%c0_30, %c15_31, %c256_32] : memref<2x16x384xf32, #tpu.memory_space<vmem>>, vector<2x1x128xf32>
    tpu.vector_store %arg6[%c0_30, %c15_31, %c256_32], %22 {strides = array<i32>} : memref<2x16x384xf32, #tpu.memory_space<vmem>>, vector<2x1x128xf32>,
    %c0_33 = arith.constant 0 : index
    %c0_34 = arith.constant 0 : index
    %c0_35 = arith.constant 0 : index
    %24 = vector.load %arg6[%c0_33, %c0_34, %c0_35] : memref<2x16x384xf32, #tpu.memory_space<vmem>>, vector<2x16x384xf32>
    %25 = vector.shape_cast %24 : vector<2x16x384xf32> to vector<32x384xf32>
    %c0_36 = arith.constant 0 : index
    %c0_37 = arith.constant 0 : index
    %26 = vector.load %arg3[%c0_36, %c0_37] : memref<384x128xf32, #tpu.memory_space<vmem>>, vector<384x128xf32>
    %cst_38 = arith.constant dense<0.000000e+00> : vector<32x128xf32>
    %27 = tpu.matmul %25, %26, %cst_38 {dimension_numbers = #tpu.dot_dimension_numbers<[1], [0], [0], [1], [0, 0, 1, 1], [], []>} : vector<32x384xf32>, vector<384x128xf32>, vector<32x128xf32> -> vector<32x128xf32>
    %28 = vector.shape_cast %27 : vector<32x128xf32> to vector<2x16x128xf32>
    %29 = arith.addf %0, %28 : vector<2x16x128xf32>
    %c0_39 = arith.constant 0 : index
    %c0_40 = arith.constant 0 : index
    %30 = vector.load %arg4[%c0_39, %c0_40] : memref<1x128xf32, #tpu.memory_space<vmem>>, vector<1x128xf32>
    %31 = vector.shape_cast %30 : vector<1x128xf32> to vector<1x1x128xf32>
    %32 = vector.broadcast %31 : vector<1x1x128xf32> to vector<2x16x128xf32>
    %33 = arith.addf %29, %32 : vector<2x16x128xf32>
    %c0_41 = arith.constant 0 : index
    %c0_42 = arith.constant 0 : index
    %c0_43 = arith.constant 0 : index
    %34 = vector.load %arg5[%c0_41, %c0_42, %c0_43] : memref<2x16x128xf32, #tpu.memory_space<vmem>>, vector<2x16x128xf32>
    tpu.vector_store %arg5[%c0_41, %c0_42, %c0_43], %33 {strides = array<i32>} : memref<2x16x128xf32, #tpu.memory_space<vmem>>, vector<2x16x128xf32>,
    return
  }
  func.func @transform_0(%arg0: i32) -> (i32, i32, i32) {
    %c0_i32 = arith.constant 0 : i32
    %c0_i32_0 = arith.constant 0 : i32
    %c0_i32_1 = arith.constant 0 : i32
    return %arg0, %c0_i32, %c0_i32_0 : i32, i32, i32
  }
  func.func @transform_1(%arg0: i32) -> (i32, i32) {
    %c0_i32 = arith.constant 0 : i32
    %c0_i32_0 = arith.constant 0 : i32
    %c0_i32_1 = arith.constant 0 : i32
    return %c0_i32, %c0_i32_0 : i32, i32
  }
  func.func @transform_2(%arg0: i32) -> (i32, i32) {
    %c0_i32 = arith.constant 0 : i32
    %c0_i32_0 = arith.constant 0 : i32
    %c0_i32_1 = arith.constant 0 : i32
    return %c0_i32, %c0_i32_0 : i32, i32
  }
  func.func @transform_3(%arg0: i32) -> (i32, i32) {
    %c0_i32 = arith.constant 0 : i32
    %c0_i32_0 = arith.constant 0 : i32
    %c0_i32_1 = arith.constant 0 : i32
    return %c0_i32, %c0_i32_0 : i32, i32
  }
  func.func @transform_4(%arg0: i32) -> (i32, i32, i32) {
    %c0_i32 = arith.constant 0 : i32
    %c0_i32_0 = arith.constant 0 : i32
    %c0_i32_1 = arith.constant 0 : i32
    return %arg0, %c0_i32, %c0_i32_0 : i32, i32, i32
  }
}

</mosaic_0001>

<llo_original>
// kernel: residual_block.1
$region0: #{residual_block.1}
  #allocation0 [shape = 'u32[]', space=smem, size = 0x4, offset = 0x4, fixed_abs, tag = 'smem constant byte address 0x4 - core index']
  #allocation1 [shape = 'u32[144,128]{1,0:T(1,128)}', space=vmem, size = 0x12000, scoped, tag = 'internal scratch']
  #allocation2 [shape = 'f32[2,16,384]{2,1,0:T(8,128)}', space=vmem, size = 0xc000, scoped, tag = 'scratch operand']
  %s0 = inlined_call_operand.vmem [shape: f32[2,16,128], index: 0, kind: input, shape index: {}]
  %s1 = inlined_call_operand.vmem [shape: f32[384,128], index: 1, kind: input, shape index: {}]
  %s2 = inlined_call_operand.vmem [shape: f32[384,128], index: 2, kind: input, shape index: {}]
  %s3 = inlined_call_operand.vmem [shape: f32[1,128], index: 3, kind: input, shape index: {}]
  %s4 = inlined_call_operand.vmem [shape: f32[2,16,128], index: 4, kind: output, shape index: {}]
  %s5 = sld [smem:[#allocation0]]
  $region26: #{residual_block.1} parent=0
    _
  %s7 = ssub.s32 1, %s5
  %s8 = scalar_select 0, %s7, %s5
  // Predicated region
  $region2: #{residual_block.1} parent=0 // pred_check
    _
  $region3: #{residual_block.1} parent=0 // pred_check_branch
    %10 = sbr.rel (0) target = $region5
  $region4: #{residual_block.1} parent=0 // pred_region
    _
  $region5: #{residual_block.1} parent=0 // pred_fallthru
    _
  // Predicated region
  $region6: #{residual_block.1} parent=0 // pred_check
    _
  $region7: #{residual_block.1} parent=0 // pred_check_branch
    %12 = sbr.rel (0) target = $region9
  $region8: #{residual_block.1} parent=0 // pred_region
    _
  $region9: #{residual_block.1} parent=0 // pred_fallthru
    _
  // Predicated region
  $region10: #{residual_block.1} parent=0 // pred_check
    _
  $region11: #{residual_block.1} parent=0 // pred_check_branch
    %14 = sbr.rel (0) target = $region13
  $region12: #{residual_block.1} parent=0 // pred_region
    _
  $region13: #{residual_block.1} parent=0 // pred_fallthru
    _
  // Predicated region
  $region14: #{residual_block.1} parent=0 // pred_check
    _
  $region15: #{residual_block.1} parent=0 // pred_check_branch
    %16 = sbr.rel (0) target = $region17
  $region16: #{residual_block.1} parent=0 // pred_region
    _
  $region17: #{residual_block.1} parent=0 // pred_fallthru
    _
  %v17 = vld [vmem:[%s0] sm:$0xff]
  %v18 = vld [vmem:[%s0 + $0x8] sm:$0xff]
  %v19 = vld [vmem:[%s0 + $0x10] sm:$0xff]
  %v20 = vld [vmem:[%s0 + $0x18] sm:$0xff]
  %21 = vst [vmem:[#allocation2 + $0x8] sm:$0xff] %v17
  %22 = vst [vmem:[#allocation2 + $0x20] sm:$0xff] %v18
  %23 = vst [vmem:[#allocation2 + $0x38] sm:$0xff] %v19
  %24 = vst [vmem:[#allocation2 + $0x50] sm:$0xff] %v20
  %vm29 = vcmask 1040384
  %v30 = vrot.slane %v17, 7
  %v31 = vrot.slane %v18, 7
  %v32 = vsel %vm29, %v30, %v31
  %v33 = vrot.slane %v19, 7
  %v34 = vrot.slane %v20, 7
  %v35 = vsel %vm29, %v33, %v34
  %40 = vst [vmem:[#allocation2] sm:$0xfe] %v30
  %41 = vst [vmem:[#allocation2 + $0x18] sm:$0xff] %v32
  %42 = vst [vmem:[#allocation2 + $0x30] sm:$0xfe] %v33
  %43 = vst [vmem:[#allocation2 + $0x48] sm:$0xff] %v35
  %v44 = vrot.slane %v17, 1
  %v45 = vrot.slane %v19, 1
  %48 = vst [vmem:[#allocation2] sm:$0x1] %v44
  %49 = vst [vmem:[#allocation2 + $0x30] sm:$0x1] %v45
  %vm50 = vcmask 1046528
  %v51 = vrot.slane %v18, 1
  %v52 = vsel %vm50, %v44, %v51
  %v53 = vrot.slane %v20, 1
  %v54 = vsel %vm50, %v45, %v53
  %59 = vst [vmem:[#allocation2 + $0x10] sm:$0xff] %v52
  %60 = vst [vmem:[#allocation2 + $0x28] sm:$0x7f] %v51
  %61 = vst [vmem:[#allocation2 + $0x40] sm:$0xff] %v54
  %62 = vst [vmem:[#allocation2 + $0x58] sm:$0x7f] %v53
  %v63 = vrot.slane %v18, 6
  %v64 = vrot.slane %v20, 6
  %67 = vst [vmem:[#allocation2 + $0x2f] sm:$0x1] %v63
  %68 = vst [vmem:[#allocation2 + $0x5f] sm:$0x1] %v64
  %v69 = vld [vmem:[#allocation2] sm:$0xff]
  %v70 = vld [vmem:[#allocation2 + $0x8] sm:$0xff]
  %v71 = vld [vmem:[#allocation2 + $0x10] sm:$0xff]
  %v72 = vld [vmem:[#allocation2 + $0x18] sm:$0xff]
  %v73 = vld [vmem:[#allocation2 + $0x20] sm:$0xff]
  %v74 = vld [vmem:[#allocation2 + $0x28] sm:$0xff]
  %v75 = vld [vmem:[#allocation2 + $0x30] sm:$0xff]
  %v76 = vld [vmem:[#allocation2 + $0x38] sm:$0xff]
  %v77 = vld [vmem:[#allocation2 + $0x40] sm:$0xff]
  %v78 = vld [vmem:[#allocation2 + $0x48] sm:$0xff]
  %v79 = vld [vmem:[#allocation2 + $0x50] sm:$0xff]
  %v80 = vld [vmem:[#allocation2 + $0x58] sm:$0xff]
  %v81 = vld [vmem:[%s1] sm:$0xff]
  %v82 = vld [vmem:[%s1 + $0x8] sm:$0xff]
  %v83 = vld [vmem:[%s1 + $0x10] sm:$0xff]
  %v84 = vld [vmem:[%s1 + $0x18] sm:$0xff]
  %v85 = vld [vmem:[%s1 + $0x20] sm:$0xff]
  %v86 = vld [vmem:[%s1 + $0x28] sm:$0xff]
  %v87 = vld [vmem:[%s1 + $0x30] sm:$0xff]
  %v88 = vld [vmem:[%s1 + $0x38] sm:$0xff]
  %v89 = vld [vmem:[%s1 + $0x40] sm:$0xff]
  %v90 = vld [vmem:[%s1 + $0x48] sm:$0xff]
  %v91 = vld [vmem:[%s1 + $0x50] sm:$0xff]
  %v92 = vld [vmem:[%s1 + $0x58] sm:$0xff]
  %v93 = vld [vmem:[%s1 + $0x60] sm:$0xff]
  %v94 = vld [vmem:[%s1 + $0x68] sm:$0xff]
  %v95 = vld [vmem:[%s1 + $0x70] sm:$0xff]
  %v96 = vld [vmem:[%s1 + $0x78] sm:$0xff]
  %v97 = vld [vmem:[%s1 + $0x80] sm:$0xff]
  %v98 = vld [vmem:[%s1 + $0x88] sm:$0xff]
  %v99 = vld [vmem:[%s1 + $0x90] sm:$0xff]
  %v100 = vld [vmem:[%s1 + $0x98] sm:$0xff]
  %v101 = vld [vmem:[%s1 + $0xa0] sm:$0xff]
  %v102 = vld [vmem:[%s1 + $0xa8] sm:$0xff]
  %v103 = vld [vmem:[%s1 + $0xb0] sm:$0xff]
  %v104 = vld [vmem:[%s1 + $0xb8] sm:$0xff]
  %v105 = vld [vmem:[%s1 + $0xc0] sm:$0xff]
  %v106 = vld [vmem:[%s1 + $0xc8] sm:$0xff]
  %v107 = vld [vmem:[%s1 + $0xd0] sm:$0xff]
  %v108 = vld [vmem:[%s1 + $0xd8] sm:$0xff]
  %v109 = vld [vmem:[%s1 + $0xe0] sm:$0xff]
  %v110 = vld [vmem:[%s1 + $0xe8] sm:$0xff]
  %v111 = vld [vmem:[%s1 + $0xf0] sm:$0xff]
  %v112 = vld [vmem:[%s1 + $0xf8] sm:$0xff]
  %v113 = vld [vmem:[%s1 + $0x100] sm:$0xff]
  %v114 = vld [vmem:[%s1 + $0x108] sm:$0xff]
  %v115 = vld [vmem:[%s1 + $0x110] sm:$0xff]
  %v116 = vld [vmem:[%s1 + $0x118] sm:$0xff]
  %v117 = vld [vmem:[%s1 + $0x120] sm:$0xff]
  %v118 = vld [vmem:[%s1 + $0x128] sm:$0xff]
  %v119 = vld [vmem:[%s1 + $0x130] sm:$0xff]
  %v120 = vld [vmem:[%s1 + $0x138] sm:$0xff]
  %v121 = vld [vmem:[%s1 + $0x140] sm:$0xff]
  %v122 = vld [vmem:[%s1 + $0x148] sm:$0xff]
  %v123 = vld [vmem:[%s1 + $0x150] sm:$0xff]
  %v124 = vld [vmem:[%s1 + $0x158] sm:$0xff]
  %v125 = vld [vmem:[%s1 + $0x160] sm:$0xff]
  %v126 = vld [vmem:[%s1 + $0x168] sm:$0xff]
  %v127 = vld [vmem:[%s1 + $0x170] sm:$0xff]
  %v128 = vld [vmem:[%s1 + $0x178] sm:$0xff]
  %129 = vmatprep.subr.mxu0 0.0
  %130 = vmatpush1.msra.mxu0 %v81
  %131 = vmatprep.subr.mxu0 0.0
  %132 = vmatpush1.msra.mxu0 %v82
  %133 = vmatprep.subr.mxu0 0.0
  %134 = vmatpush1.msra.mxu0 %v83
  %135 = vmatprep.subr.mxu0 0.0
  %136 = vmatpush1.msra.mxu0 %v84
  %137 = vmatprep.subr.mxu0 0.0
  %138 = vmatpush1.msra.mxu0 %v85
  %139 = vmatprep.subr.mxu0 0.0
  %140 = vmatpush1.msra.mxu0 %v86
  %141 = vmatprep.subr.mxu0 0.0
  %142 = vmatpush1.msra.mxu0 %v87
  %143 = vmatprep.subr.mxu0 0.0
  %144 = vmatpush1.msra.mxu0 %v88
  %145 = vmatprep.subr.mxu0 0.0
  %146 = vmatpush1.msra.mxu0 %v89
  %147 = vmatprep.subr.mxu0 0.0
  %148 = vmatpush1.msra.mxu0 %v90
  %149 = vmatprep.subr.mxu0 0.0
  %150 = vmatpush1.msra.mxu0 %v91
  %151 = vmatprep.subr.mxu0 0.0
  %152 = vmatpush1.msra.mxu0 %v92
  %153 = vmatprep.subr.mxu0 0.0
  %154 = vmatpush1.msra.mxu0 %v93
  %155 = vmatprep.subr.mxu0 0.0
  %156 = vmatpush1.msra.mxu0 %v94
  %157 = vmatprep.subr.mxu0 0.0
  %158 = vmatpush1.msra.mxu0 %v95
  %159 = vmatprep.subr.mxu0 0.0
  %160 = vmatpush1.msra.mxu0 %v96
  %161 = vmatprep.subr.mxu0 0.0
  %162 = vmatpush1.msra.mxu0 %v97
  %163 = vmatprep.subr.mxu0 0.0
  %164 = vmatpush1.msra.mxu0 %v98
  %165 = vmatprep.subr.mxu0 0.0
  %166 = vmatpush1.msra.mxu0 %v99
  %167 = vmatprep.subr.mxu0 0.0
  %168 = vmatpush1.msra.mxu0 %v100
  %169 = vmatprep.subr.mxu0 0.0
  %170 = vmatpush1.msra.mxu0 %v101
  %171 = vmatprep.subr.mxu0 0.0
  %172 = vmatpush1.msra.mxu0 %v102
  %173 = vmatprep.subr.mxu0 0.0
  %174 = vmatpush1.msra.mxu0 %v103
  %175 = vmatprep.subr.mxu0 0.0
  %176 = vmatpush1.msra.mxu0 %v104
  %177 = vmatprep.subr.mxu0 0.0
  %178 = vmatpush1.msra.mxu0 %v105
  %179 = vmatprep.subr.mxu0 0.0
  %180 = vmatpush1.msra.mxu0 %v106
  %181 = vmatprep.subr.mxu0 0.0
  %182 = vmatpush1.msra.mxu0 %v107
  %183 = vmatprep.subr.mxu0 0.0
  %184 = vmatpush1.msra.mxu0 %v108
  %185 = vmatprep.subr.mxu0 0.0
  %186 = vmatpush1.msra.mxu0 %v109
  %187 = vmatprep.subr.mxu0 0.0
  %188 = vmatpush1.msra.mxu0 %v110
  %189 = vmatprep.subr.mxu0 0.0
  %190 = vmatpush1.msra.mxu0 %v111
  %191 = vmatprep.subr.mxu0 0.0
  %192 = vmatpush1.msra.mxu0 %v112
  %193 = vmatprep.mubr.f32.mxu0 %v70
  %194 = vmatmul.mubr.f32.gmra.mrb[0].mxu0 %v69
  %v195 = vpop.f32.mrb[0].mxu0
  %v196 = vadd.f32 0.0, %v195
  %v197 = vpop.f32.mrb[0].mxu0
  %198 = vmatprep.mubr.f32.mxu0 %v73
  %199 = vmatmul.mubr.f32.gmra.mrb[0].mxu0 %v72
  %v200 = vpop.f32.mrb[0].mxu0
  %v201 = vadd.f32 0.0, %v200
  %v202 = vpop.f32.mrb[0].mxu0
  %203 = vmatprep.mubr.f32.mxu0 %v76
  %204 = vmatmul.mubr.f32.gmra.mrb[0].mxu0 %v75
  %v205 = vpop.f32.mrb[0].mxu0
  %v206 = vadd.f32 0.0, %v205
  %v207 = vpop.f32.mrb[0].mxu0
  %208 = vmatprep.mubr.f32.mxu0 %v79
  %209 = vmatmul.mubr.f32.gmra.mrb[0].mxu0 %v78
  %v210 = vpop.f32.mrb[0].mxu0
  %v211 = vadd.f32 0.0, %v210
  %v212 = vpop.f32.mrb[0].mxu0
  %213 = vdwg.mxu0
  %214 = vmatprep.subr.mxu0 0.0
  %215 = vmatpush1.msra.mxu0 %v113
  %216 = vmatprep.subr.mxu0 0.0
  %217 = vmatpush1.msra.mxu0 %v114
  %218 = vmatprep.subr.mxu0 0.0
  %219 = vmatpush1.msra.mxu0 %v115
  %220 = vmatprep.subr.mxu0 0.0
  %221 = vmatpush1.msra.mxu0 %v116
  %222 = vmatprep.subr.mxu0 0.0
  %223 = vmatpush1.msra.mxu0 %v117
  %224 = vmatprep.subr.mxu0 0.0
  %225 = vmatpush1.msra.mxu0 %v118
  %226 = vmatprep.subr.mxu0 0.0
  %227 = vmatpush1.msra.mxu0 %v119
  %228 = vmatprep.subr.mxu0 0.0
  %229 = vmatpush1.msra.mxu0 %v120
  %230 = vmatprep.subr.mxu0 0.0
  %231 = vmatpush1.msra.mxu0 %v121
  %232 = vmatprep.subr.mxu0 0.0
  %233 = vmatpush1.msra.mxu0 %v122
  %234 = vmatprep.subr.mxu0 0.0
  %235 = vmatpush1.msra.mxu0 %v123
  %236 = vmatprep.subr.mxu0 0.0
  %237 = vmatpush1.msra.mxu0 %v124
  %238 = vmatprep.subr.mxu0 0.0
  %239 = vmatpush1.msra.mxu0 %v125
  %240 = vmatprep.subr.mxu0 0.0
  %241 = vmatpush1.msra.mxu0 %v126
  %242 = vmatprep.subr.mxu0 0.0
  %243 = vmatpush1.msra.mxu0 %v127
  %244 = vmatprep.subr.mxu0 0.0
  %245 = vmatpush1.msra.mxu0 %v128
  %246 = vmatprep.subr.mxu0 0.0
  %247 = vmatpush1.msra.mxu0 0.0
  %248 = vmatprep.subr.mxu0 0.0
  %249 = vmatpush1.msra.mxu0 0.0
  %250 = vmatprep.subr.mxu0 0.0
  %251 = vmatpush1.msra.mxu0 0.0
  %252 = vmatprep.subr.mxu0 0.0
  %253 = vmatpush1.msra.mxu0 0.0
  %254 = vmatprep.subr.mxu0 0.0
  %255 = vmatpush1.msra.mxu0 0.0
  %256 = vmatprep.subr.mxu0 0.0
  %257 = vmatpush1.msra.mxu0 0.0
  %258 = vmatprep.subr.mxu0 0.0
  %259 = vmatpush1.msra.mxu0 0.0
  %260 = vmatprep.subr.mxu0 0.0
  %261 = vmatpush1.msra.mxu0 0.0
  %262 = vmatprep.subr.mxu0 0.0
  %263 = vmatpush1.msra.mxu0 0.0
  %264 = vmatprep.subr.mxu0 0.0
  %265 = vmatpush1.msra.mxu0 0.0
  %266 = vmatprep.subr.mxu0 0.0
  %267 = vmatpush1.msra.mxu0 0.0
  %268 = vmatprep.subr.mxu0 0.0
  %269 = vmatpush1.msra.mxu0 0.0
  %270 = vmatprep.subr.mxu0 0.0
  %271 = vmatpush1.msra.mxu0 0.0
  %272 = vmatprep.subr.mxu0 0.0
  %273 = vmatpush1.msra.mxu0 0.0
  %274 = vmatprep.subr.mxu0 0.0
  %275 = vmatpush1.msra.mxu0 0.0
  %276 = vmatprep.subr.mxu0 0.0
  %277 = vmatpush1.msra.mxu0 0.0
  %278 = vmatprep.mubr.f32.mxu0 0.0
  %279 = vmatmul.mubr.f32.gmra.mrb[0].mxu0 %v71
  %v280 = vpop.f32.mrb[0].mxu0
  %v281 = vadd.f32 %v196, %v280
  %v282 = vpop.f32.mrb[0].mxu0
  %283 = vmatprep.mubr.f32.mxu0 0.0
  %284 = vmatmul.mubr.f32.gmra.mrb[0].mxu0 %v74
  %v285 = vpop.f32.mrb[0].mxu0
  %v286 = vadd.f32 %v201, %v285
  %v287 = vpop.f32.mrb[0].mxu0
  %288 = vmatprep.mubr.f32.mxu0 0.0
  %289 = vmatmul.mubr.f32.gmra.mrb[0].mxu0 %v77
  %v290 = vpop.f32.mrb[0].mxu0
  %v291 = vadd.f32 %v206, %v290
  %v292 = vpop.f32.mrb[0].mxu0
  %293 = vmatprep.mubr.f32.mxu0 0.0
  %294 = vmatmul.mubr.f32.gmra.mrb[0].mxu0 %v80
  %v295 = vpop.f32.mrb[0].mxu0
  %v296 = vadd.f32 %v211, %v295
  %v297 = vpop.f32.mrb[0].mxu0
  %298 = vdwg.mxu0
  %299 = vst [vmem:[#allocation2 + $0x8] sm:$0xff] %v281
  %300 = vst [vmem:[#allocation2 + $0x20] sm:$0xff] %v286
  %301 = vst [vmem:[#allocation2 + $0x38] sm:$0xff] %v291
  %302 = vst [vmem:[#allocation2 + $0x50] sm:$0xff] %v296
  %v307 = vrot.slane %v281, 7
  %v308 = vrot.slane %v286, 7
  %v309 = vsel %vm29, %v307, %v308
  %v310 = vrot.slane %v291, 7
  %v311 = vrot.slane %v296, 7
  %v312 = vsel %vm29, %v310, %v311
  %317 = vst [vmem:[#allocation2] sm:$0xfe] %v307
  %318 = vst [vmem:[#allocation2 + $0x18] sm:$0xff] %v309
  %319 = vst [vmem:[#allocation2 + $0x30] sm:$0xfe] %v310
  %320 = vst [vmem:[#allocation2 + $0x48] sm:$0xff] %v312
  %v321 = vrot.slane %v281, 1
  %v322 = vrot.slane %v291, 1
  %325 = vst [vmem:[#allocation2] sm:$0x1] %v321
  %326 = vst [vmem:[#allocation2 + $0x30] sm:$0x1] %v322
  %v327 = vrot.slane %v286, 1
  %v328 = vsel %vm50, %v321, %v327
  %v329 = vrot.slane %v296, 1
  %v330 = vsel %vm50, %v322, %v329
  %335 = vst [vmem:[#allocation2 + $0x10] sm:$0xff] %v328
  %336 = vst [vmem:[#allocation2 + $0x28] sm:$0x7f] %v327
  %337 = vst [vmem:[#allocation2 + $0x40] sm:$0xff] %v330
  %338 = vst [vmem:[#allocation2 + $0x58] sm:$0x7f] %v329
  %v339 = vrot.slane %v286, 6
  %v340 = vrot.slane %v296, 6
  %343 = vst [vmem:[#allocation2 + $0x2f] sm:$0x1] %v339
  %344 = vst [vmem:[#allocation2 + $0x5f] sm:$0x1] %v340
  %v345 = vld [vmem:[#allocation2] sm:$0xff]
  %v346 = vld [vmem:[#allocation2 + $0x8] sm:$0xff]
  %v347 = vld [vmem:[#allocation2 + $0x10] sm:$0xff]
  %v348 = vld [vmem:[#allocation2 + $0x18] sm:$0xff]
  %v349 = vld [vmem:[#allocation2 + $0x20] sm:$0xff]
  %v350 = vld [vmem:[#allocation2 + $0x28] sm:$0xff]
  %v351 = vld [vmem:[#allocation2 + $0x30] sm:$0xff]
  %v352 = vld [vmem:[#allocation2 + $0x38] sm:$0xff]
  %v353 = vld [vmem:[#allocation2 + $0x40] sm:$0xff]
  %v354 = vld [vmem:[#allocation2 + $0x48] sm:$0xff]
  %v355 = vld [vmem:[#allocation2 + $0x50] sm:$0xff]
  %v356 = vld [vmem:[#allocation2 + $0x58] sm:$0xff]
  %v357 = vld [vmem:[%s2] sm:$0xff]
  %v358 = vld [vmem:[%s2 + $0x8] sm:$0xff]
  %v359 = vld [vmem:[%s2 + $0x10] sm:$0xff]
  %v360 = vld [vmem:[%s2 + $0x18] sm:$0xff]
  %v361 = vld [vmem:[%s2 + $0x20] sm:$0xff]
  %v362 = vld [vmem:[%s2 + $0x28] sm:$0xff]
  %v363 = vld [vmem:[%s2 + $0x30] sm:$0xff]
  %v364 = vld [vmem:[%s2 + $0x38] sm:$0xff]
  %v365 = vld [vmem:[%s2 + $0x40] sm:$0xff]
  %v366 = vld [vmem:[%s2 + $0x48] sm:$0xff]
  %v367 = vld [vmem:[%s2 + $0x50] sm:$0xff]
  %v368 = vld [vmem:[%s2 + $0x58] sm:$0xff]
  %v369 = vld [vmem:[%s2 + $0x60] sm:$0xff]
  %v370 = vld [vmem:[%s2 + $0x68] sm:$0xff]
  %v371 = vld [vmem:[%s2 + $0x70] sm:$0xff]
  %v372 = vld [vmem:[%s2 + $0x78] sm:$0xff]
  %v373 = vld [vmem:[%s2 + $0x80] sm:$0xff]
  %v374 = vld [vmem:[%s2 + $0x88] sm:$0xff]
  %v375 = vld [vmem:[%s2 + $0x90] sm:$0xff]
  %v376 = vld [vmem:[%s2 + $0x98] sm:$0xff]
  %v377 = vld [vmem:[%s2 + $0xa0] sm:$0xff]
  %v378 = vld [vmem:[%s2 + $0xa8] sm:$0xff]
  %v379 = vld [vmem:[%s2 + $0xb0] sm:$0xff]
  %v380 = vld [vmem:[%s2 + $0xb8] sm:$0xff]
  %v381 = vld [vmem:[%s2 + $0xc0] sm:$0xff]
  %v382 = vld [vmem:[%s2 + $0xc8] sm:$0xff]
  %v383 = vld [vmem:[%s2 + $0xd0] sm:$0xff]
  %v384 = vld [vmem:[%s2 + $0xd8] sm:$0xff]
  %v385 = vld [vmem:[%s2 + $0xe0] sm:$0xff]
  %v386 = vld [vmem:[%s2 + $0xe8] sm:$0xff]
  %v387 = vld [vmem:[%s2 + $0xf0] sm:$0xff]
  %v388 = vld [vmem:[%s2 + $0xf8] sm:$0xff]
  %v389 = vld [vmem:[%s2 + $0x100] sm:$0xff]
  %v390 = vld [vmem:[%s2 + $0x108] sm:$0xff]
  %v391 = vld [vmem:[%s2 + $0x110] sm:$0xff]
  %v392 = vld [vmem:[%s2 + $0x118] sm:$0xff]
  %v393 = vld [vmem:[%s2 + $0x120] sm:$0xff]
  %v394 = vld [vmem:[%s2 + $0x128] sm:$0xff]
  %v395 = vld [vmem:[%s2 + $0x130] sm:$0xff]
  %v396 = vld [vmem:[%s2 + $0x138] sm:$0xff]
  %v397 = vld [vmem:[%s2 + $0x140] sm:$0xff]
  %v398 = vld [vmem:[%s2 + $0x148] sm:$0xff]
  %v399 = vld [vmem:[%s2 + $0x150] sm:$0xff]
  %v400 = vld [vmem:[%s2 + $0x158] sm:$0xff]
  %v401 = vld [vmem:[%s2 + $0x160] sm:$0xff]
  %v402 = vld [vmem:[%s2 + $0x168] sm:$0xff]
  %v403 = vld [vmem:[%s2 + $0x170] sm:$0xff]
  %v404 = vld [vmem:[%s2 + $0x178] sm:$0xff]
  %405 = vmatprep.subr.mxu0 0.0
  %406 = vmatpush1.msra.mxu0 %v357
  %407 = vmatprep.subr.mxu0 0.0
  %408 = vmatpush1.msra.mxu0 %v358
  %409 = vmatprep.subr.mxu0 0.0
  %410 = vmatpush1.msra.mxu0 %v359
  %411 = vmatprep.subr.mxu0 0.0
  %412 = vmatpush1.msra.mxu0 %v360
  %413 = vmatprep.subr.mxu0 0.0
  %414 = vmatpush1.msra.mxu0 %v361
  %415 = vmatprep.subr.mxu0 0.0
  %416 = vmatpush1.msra.mxu0 %v362
  %417 = vmatprep.subr.mxu0 0.0
  %418 = vmatpush1.msra.mxu0 %v363
  %419 = vmatprep.subr.mxu0 0.0
  %420 = vmatpush1.msra.mxu0 %v364
  %421 = vmatprep.subr.mxu0 0.0
  %422 = vmatpush1.msra.mxu0 %v365
  %423 = vmatprep.subr.mxu0 0.0
  %424 = vmatpush1.msra.mxu0 %v366
  %425 = vmatprep.subr.mxu0 0.0
  %426 = vmatpush1.msra.mxu0 %v367
  %427 = vmatprep.subr.mxu0 0.0
  %428 = vmatpush1.msra.mxu0 %v368
  %429 = vmatprep.subr.mxu0 0.0
  %430 = vmatpush1.msra.mxu0 %v369
  %431 = vmatprep.subr.mxu0 0.0
  %432 = vmatpush1.msra.mxu0 %v370
  %433 = vmatprep.subr.mxu0 0.0
  %434 = vmatpush1.msra.mxu0 %v371
  %435 = vmatprep.subr.mxu0 0.0
  %436 = vmatpush1.msra.mxu0 %v372
  %437 = vmatprep.subr.mxu0 0.0
  %438 = vmatpush1.msra.mxu0 %v373
  %439 = vmatprep.subr.mxu0 0.0
  %440 = vmatpush1.msra.mxu0 %v374
  %441 = vmatprep.subr.mxu0 0.0
  %442 = vmatpush1.msra.mxu0 %v375
  %443 = vmatprep.subr.mxu0 0.0
  %444 = vmatpush1.msra.mxu0 %v376
  %445 = vmatprep.subr.mxu0 0.0
  %446 = vmatpush1.msra.mxu0 %v377
  %447 = vmatprep.subr.mxu0 0.0
  %448 = vmatpush1.msra.mxu0 %v378
  %449 = vmatprep.subr.mxu0 0.0
  %450 = vmatpush1.msra.mxu0 %v379
  %451 = vmatprep.subr.mxu0 0.0
  %452 = vmatpush1.msra.mxu0 %v380
  %453 = vmatprep.subr.mxu0 0.0
  %454 = vmatpush1.msra.mxu0 %v381
  %455 = vmatprep.subr.mxu0 0.0
  %456 = vmatpush1.msra.mxu0 %v382
  %457 = vmatprep.subr.mxu0 0.0
  %458 = vmatpush1.msra.mxu0 %v383
  %459 = vmatprep.subr.mxu0 0.0
  %460 = vmatpush1.msra.mxu0 %v384
  %461 = vmatprep.subr.mxu0 0.0
  %462 = vmatpush1.msra.mxu0 %v385
  %463 = vmatprep.subr.mxu0 0.0
  %464 = vmatpush1.msra.mxu0 %v386
  %465 = vmatprep.subr.mxu0 0.0
  %466 = vmatpush1.msra.mxu0 %v387
  %467 = vmatprep.subr.mxu0 0.0
  %468 = vmatpush1.msra.mxu0 %v388
  %469 = vmatprep.mubr.f32.mxu0 %v346
  %470 = vmatmul.mubr.f32.gmra.mrb[0].mxu0 %v345
  %v471 = vpop.f32.mrb[0].mxu0
  %v472 = vadd.f32 0.0, %v471
  %v473 = vpop.f32.mrb[0].mxu0
  %474 = vmatprep.mubr.f32.mxu0 %v349
  %475 = vmatmul.mubr.f32.gmra.mrb[0].mxu0 %v348
  %v476 = vpop.f32.mrb[0].mxu0
  %v477 = vadd.f32 0.0, %v476
  %v478 = vpop.f32.mrb[0].mxu0
  %479 = vmatprep.mubr.f32.mxu0 %v352
  %480 = vmatmul.mubr.f32.gmra.mrb[0].mxu0 %v351
  %v481 = vpop.f32.mrb[0].mxu0
  %v482 = vadd.f32 0.0, %v481
  %v483 = vpop.f32.mrb[0].mxu0
  %484 = vmatprep.mubr.f32.mxu0 %v355
  %485 = vmatmul.mubr.f32.gmra.mrb[0].mxu0 %v354
  %v486 = vpop.f32.mrb[0].mxu0
  %v487 = vadd.f32 0.0, %v486
  %v488 = vpop.f32.mrb[0].mxu0
  %489 = vdwg.mxu0
  %490 = vmatprep.subr.mxu0 0.0
  %491 = vmatpush1.msra.mxu0 %v389
  %492 = vmatprep.subr.mxu0 0.0
  %493 = vmatpush1.msra.mxu0 %v390
  %494 = vmatprep.subr.mxu0 0.0
  %495 = vmatpush1.msra.mxu0 %v391
  %496 = vmatprep.subr.mxu0 0.0
  %497 = vmatpush1.msra.mxu0 %v392
  %498 = vmatprep.subr.mxu0 0.0
  %499 = vmatpush1.msra.mxu0 %v393
  %500 = vmatprep.subr.mxu0 0.0
  %501 = vmatpush1.msra.mxu0 %v394
  %502 = vmatprep.subr.mxu0 0.0
  %503 = vmatpush1.msra.mxu0 %v395
  %504 = vmatprep.subr.mxu0 0.0
  %505 = vmatpush1.msra.mxu0 %v396
  %506 = vmatprep.subr.mxu0 0.0
  %507 = vmatpush1.msra.mxu0 %v397
  %508 = vmatprep.subr.mxu0 0.0
  %509 = vmatpush1.msra.mxu0 %v398
  %510 = vmatprep.subr.mxu0 0.0
  %511 = vmatpush1.msra.mxu0 %v399
  %512 = vmatprep.subr.mxu0 0.0
  %513 = vmatpush1.msra.mxu0 %v400
  %514 = vmatprep.subr.mxu0 0.0
  %515 = vmatpush1.msra.mxu0 %v401
  %516 = vmatprep.subr.mxu0 0.0
  %517 = vmatpush1.msra.mxu0 %v402
  %518 = vmatprep.subr.mxu0 0.0
  %519 = vmatpush1.msra.mxu0 %v403
  %520 = vmatprep.subr.mxu0 0.0
  %521 = vmatpush1.msra.mxu0 %v404
  %522 = vmatprep.subr.mxu0 0.0
  %523 = vmatpush1.msra.mxu0 0.0
  %524 = vmatprep.subr.mxu0 0.0
  %525 = vmatpush1.msra.mxu0 0.0
  %526 = vmatprep.subr.mxu0 0.0
  %527 = vmatpush1.msra.mxu0 0.0
  %528 = vmatprep.subr.mxu0 0.0
  %529 = vmatpush1.msra.mxu0 0.0
  %530 = vmatprep.subr.mxu0 0.0
  %531 = vmatpush1.msra.mxu0 0.0
  %532 = vmatprep.subr.mxu0 0.0
  %533 = vmatpush1.msra.mxu0 0.0
  %534 = vmatprep.subr.mxu0 0.0
  %535 = vmatpush1.msra.mxu0 0.0
  %536 = vmatprep.subr.mxu0 0.0
  %537 = vmatpush1.msra.mxu0 0.0
  %538 = vmatprep.subr.mxu0 0.0
  %539 = vmatpush1.msra.mxu0 0.0
  %540 = vmatprep.subr.mxu0 0.0
  %541 = vmatpush1.msra.mxu0 0.0
  %542 = vmatprep.subr.mxu0 0.0
  %543 = vmatpush1.msra.mxu0 0.0
  %544 = vmatprep.subr.mxu0 0.0
  %545 = vmatpush1.msra.mxu0 0.0
  %546 = vmatprep.subr.mxu0 0.0
  %547 = vmatpush1.msra.mxu0 0.0
  %548 = vmatprep.subr.mxu0 0.0
  %549 = vmatpush1.msra.mxu0 0.0
  %550 = vmatprep.subr.mxu0 0.0
  %551 = vmatpush1.msra.mxu0 0.0
  %552 = vmatprep.subr.mxu0 0.0
  %553 = vmatpush1.msra.mxu0 0.0
  %554 = vmatprep.mubr.f32.mxu0 0.0
  %555 = vmatmul.mubr.f32.gmra.mrb[0].mxu0 %v347
  %v556 = vpop.f32.mrb[0].mxu0
  %v557 = vadd.f32 %v472, %v556
  %v558 = vpop.f32.mrb[0].mxu0
  %559 = vmatprep.mubr.f32.mxu0 0.0
  %560 = vmatmul.mubr.f32.gmra.mrb[0].mxu0 %v350
  %v561 = vpop.f32.mrb[0].mxu0
  %v562 = vadd.f32 %v477, %v561
  %v563 = vpop.f32.mrb[0].mxu0
  %564 = vmatprep.mubr.f32.mxu0 0.0
  %565 = vmatmul.mubr.f32.gmra.mrb[0].mxu0 %v353
  %v566 = vpop.f32.mrb[0].mxu0
  %v567 = vadd.f32 %v482, %v566
  %v568 = vpop.f32.mrb[0].mxu0
  %569 = vmatprep.mubr.f32.mxu0 0.0
  %570 = vmatmul.mubr.f32.gmra.mrb[0].mxu0 %v356
  %v571 = vpop.f32.mrb[0].mxu0
  %v572 = vadd.f32 %v487, %v571
  %v573 = vpop.f32.mrb[0].mxu0
  %574 = vdwg.mxu0
  %v575 = vadd.f32 %v17, %v557
  %v576 = vadd.f32 %v18, %v562
  %v577 = vadd.f32 %v19, %v567
  %v578 = vadd.f32 %v20, %v572
  %v579 = vld [vmem:[%s3] sm:$0x1]
  %v581 = vlaneseq
  %v582 = vshrl.u32 %v581, 7
  %v583 = vsub.s32 0, %v582
  %v584 = vrot.slane %v579, %v583
  %v586 = vadd.f32 %v575, %v584
  %v587 = vadd.f32 %v576, %v584
  %v588 = vadd.f32 %v577, %v584
  %v589 = vadd.f32 %v578, %v584
  %590 = vst [vmem:[%s4] sm:$0xff] %v586
  %591 = vst [vmem:[%s4 + $0x8] sm:$0xff] %v587
  %592 = vst [vmem:[%s4 + $0x10] sm:$0xff] %v588
  %593 = vst [vmem:[%s4 + $0x18] sm:$0xff] %v589
  // Predicated region
  $region18: #{residual_block.1} parent=0 // pred_check
    _
  $region19: #{residual_block.1} parent=0 // pred_check_branch
    %595 = sbr.rel (0) target = $region21
  $region20: #{residual_block.1} parent=0 // pred_region
    _
  $region21: #{residual_block.1} parent=0 // pred_fallthru
    _
  // Predicated region
  $region22: #{residual_block.1} parent=0 // pred_check
    _
  $region23: #{residual_block.1} parent=0 // pred_check_branch
    %597 = sbr.rel (0) target = $region25
  $region24: #{residual_block.1} parent=0 // pred_region
    _
  $region25: #{residual_block.1} parent=0 // pred_fallthru
    _

</llo_original>
